<compile_context>
chip_gen: v7x
topology: tpu7x:2x2x1
jax: 0.10.0
libtpu: 0.0.40
codegen_flags: <defaults>
</compile_context>

<pallas_src>
from functools import partial

import numpy as np
import jax
import jax.numpy as jnp
from jax.experimental import pallas as pl
from jax.experimental.pallas import tpu as pltpu


def _round_up(n, m):
    return ((n + m - 1) // m) * m


def _cdiv(a, b):
    return -(-a // b)


def _vmem_limit_bytes():
    # v7x has 64 MiB physical VMEM per TensorCore, v5e/v6e have 128 MiB.
    # Leave ~16 MiB headroom and never request more than 100 MiB.
    try:
        cap = int(pltpu.get_tpu_info().vmem_capacity_bytes)
    except Exception:  # hardware query unavailable -> conservative, v7x-safe
        cap = 64 * 1024 * 1024
    return int(min(cap - 16 * 1024 * 1024, 100 * 1024 * 1024))


def _fm_pallas_onehot_matmul(idx_t, w_stacked, tile_b, vmem_limit):
    """Fused FM forward for VMEM-resident vocabularies.

    idx_t:     (F, Bp)   int32 global embedding rows (batch on the lane axis)
    w_stacked: (4D, Vp)  bf16; rows [0:2D]  = hi([table^T ; (table^2)^T])
                               rows [2D:4D] = lo(...)   (f32 = hi + lo)
    returns    (1, Bp)   f32 sigmoid(FM)
    """
    F, Bp = idx_t.shape
    four_d, Vp = w_stacked.shape
    D = four_d // 4
    two_d = 2 * D

    def kernel(idx_ref, w_ref, out_ref):
        tb = idx_ref.shape[1]
        # Multi-hot count matrix M[v, b] = #fields of batch row b hitting vocab
        # row v.  Built in f32 (v5e has no native bf16 VPU), cast once for MXU.
        viota = jax.lax.broadcasted_iota(jnp.int32, (Vp, tb), 0)
        m = (viota == idx_ref[0:1, :]).astype(jnp.float32)
        for f in range(1, F):                      # F is small & static
            m = m + (viota == idx_ref[f:f + 1, :]).astype(jnp.float32)
        mb = m.astype(jnp.bfloat16)                # counts <= F: exact in bf16

        # Gather + field-sum as one MXU matmul (bf16 x bf16 -> f32 accumulate):
        #   r[0:D]   ~ sum_F emb          (hi part)     r[2D:3D] lo part
        #   r[D:2D]  ~ sum_F emb**2       (hi part)     r[3D:4D] lo part
        r = jnp.dot(w_ref[...], mb, preferred_element_type=jnp.float32)  # (4D, TB)
        r2 = r[0:two_d, :] + r[two_d:four_d, :]    # recombine hi+lo -> (2D, TB)
        s = r2[0:D, :]                             # sum_F emb        (D, TB)
        q = r2[D:two_d, :]                         # sum_F emb**2     (D, TB)

        ix = 0.5 * jnp.sum(s * s - q, axis=0, keepdims=True)   # (1, TB) sublane reduce
        out_ref[...] = jax.nn.sigmoid(ix)                       # lane-dense store

    return pl.pallas_call(
        kernel,
        out_shape=jax.ShapeDtypeStruct((1, Bp), jnp.float32),
        grid=(Bp // tile_b,),
        in_specs=[
            pl.BlockSpec((F, tile_b), lambda i: (0, i)),    # streamed index tile
            pl.BlockSpec((four_d, Vp), lambda i: (0, 0)),   # constant -> DMA'd once
        ],
        out_specs=pl.BlockSpec((1, tile_b), lambda i: (0, i)),
        compiler_params=pltpu.CompilerParams(
            dimension_semantics=("parallel",),
            vmem_limit_bytes=vmem_limit),
    )(idx_t, w_stacked)


def _fm_pallas_pregathered(emb_t, embed_dim, tile_b, vmem_limit):
    """FM reduction on a pre-gathered (F*D, Bp) f32 tensor -> (1, Bp) f32."""
    FD, Bp = emb_t.shape
    D = embed_dim
    F = FD // D

    def kernel(emb_ref, out_ref):
        e = emb_ref[...]                                    # (F*D, TB) f32
        s = e[0:D, :]
        q = s * s
        for f in range(1, F):
            blk = e[f * D:(f + 1) * D, :]                   # static sublane slice
            s = s + blk
            q = q + blk * blk
        ix = 0.5 * jnp.sum(s * s - q, axis=0, keepdims=True)
        out_ref[...] = jax.nn.sigmoid(ix)

    return pl.pallas_call(
        kernel,
        out_shape=jax.ShapeDtypeStruct((1, Bp), jnp.float32),
        grid=(Bp // tile_b,),
        in_specs=[pl.BlockSpec((FD, tile_b), lambda i: (0, i))],
        out_specs=pl.BlockSpec((1, tile_b), lambda i: (0, i)),
        compiler_params=pltpu.CompilerParams(
            dimension_semantics=("parallel",),
            vmem_limit_bytes=vmem_limit),
    )(emb_t)


@partial(jax.jit, static_argnames=("tile_b", "vmem_limit"))
def _fused_forward(x, offsets, w_stacked, tile_b, vmem_limit):
    B, _ = x.shape
    idx = x.astype(jnp.int32) + offsets[None, :]                    # (B, F) global rows
    Bp = _round_up(B, tile_b)
    idx_t = jnp.pad(idx.T, ((0, 0), (0, Bp - B)))                   # pad -> vocab row 0
    out = _fm_pallas_onehot_matmul(idx_t, w_stacked, tile_b, vmem_limit)
    return out[0, :B]


@partial(jax.jit, static_argnames=("embed_dim", "tile_b", "vmem_limit"))
def _pregathered_forward(x, offsets, weight, embed_dim, tile_b, vmem_limit):
    # TODO(synk): replace the XLA gather with a manual make_async_copy row-gather
    # kernel (table kept in HBM via memory_space=pl.ANY) for very large vocabs.
    B, F = x.shape
    idx = x.astype(jnp.int32) + offsets[None, :]
    emb = jnp.take(weight, idx, axis=0)                             # (B, F, D) f32
    Bp = _round_up(B, tile_b)
    emb_t = jnp.pad(emb.reshape(B, F * embed_dim).T, ((0, 0), (0, Bp - B)))
    out = _fm_pallas_pregathered(emb_t, embed_dim, tile_b, vmem_limit)
    return out[0, :B]


class FactorizationMachineModelNoLinear:
    """JAX/Pallas port of the torchfm module (no linear term)."""

    # Vocabularies up to this many rows use the fused one-hot-matmul kernel;
    # larger ones fall back to an XLA f32 gather + Pallas reduction kernel.
    _MATMUL_VOCAB_MAX = 4096

    def __init__(self, field_dims, embed_dim, key):
        vocab = int(np.sum(field_dims))
        limit = float(np.sqrt(6.0 / (vocab + embed_dim)))           # xavier_uniform_
        self.weight = jax.random.uniform(
            key, (vocab, embed_dim), jnp.float32, minval=-limit, maxval=limit)
        self.offsets = jnp.asarray(
            np.array((0, *np.cumsum(field_dims)[:-1]), dtype=np.int32))
        self.embed_dim = embed_dim
        self.num_fields = len(field_dims)
        self.vocab = vocab
        self._vmem_limit = _vmem_limit_bytes()
        self._use_matmul = vocab <= self._MATMUL_VOCAB_MAX
        if self._use_matmul:
            vp = _round_up(vocab, 128)
            self._vp = vp
            wt = jnp.zeros((vp, embed_dim), jnp.float32).at[:vocab, :].set(self.weight)
            # (2D, Vp): rows [0:D] = table^T, rows [D:2D] = (table**2)^T
            w_st = jnp.concatenate([wt.T, (wt * wt).T], axis=0)
            # bf16 hi/lo split so the MXU matmul reproduces f32 values
            # (relative error ~4e-6) without needing multi-pass f32 matmul.
            w_hi = w_st.astype(jnp.bfloat16)
            w_lo = (w_st - w_hi.astype(jnp.float32)).astype(jnp.bfloat16)
            self._w_stacked = jnp.concatenate([w_hi, w_lo], axis=0)  # (4D, Vp) bf16

    def _tile_b(self, batch):
        # Fat tiles (per-row HBM traffic is only ~F*4 B in + 4 B out), but:
        #  * keep the in-kernel (Vp, TB) one-hot matrix <= ~8 MiB of VMEM,
        #  * derive from ceil(B/2) so large batches give >= 2 grid steps
        #    (lets v7x's two TensorCores both work under "parallel").
        if self._use_matmul:
            cap = min(8192, max(128, ((8 << 20) // (self._vp * 4)) // 128 * 128))
        else:
            cap = 4096
        return max(128, min(cap, _round_up(_cdiv(batch, 2), 128)))

    def __call__(self, x):
        """x: int tensor (batch, num_fields) -> sigmoid(FM) of shape (batch,)."""
        tile_b = self._tile_b(int(x.shape[0]))
        if self._use_matmul:
            return _fused_forward(x, self.offsets, self._w_stacked,
                                  tile_b, self._vmem_limit)
        return _pregathered_forward(x, self.offsets, self.weight, self.embed_dim,
                                    tile_b, self._vmem_limit)


if __name__ == "__main__":
    key = jax.random.PRNGKey(0)
    k_w, k_x = jax.random.split(key)

    field_dims = [10, 20, 30, 40]
    embed_dim = 16
    batch = 8

    model = FactorizationMachineModelNoLinear(field_dims, embed_dim, k_w)

    # per-field categorical indices, each within its own field cardinality
    cols = []
    for i, fd in enumerate(field_dims):
        kf = jax.random.fold_in(k_x, i)
        cols.append(jax.random.randint(kf, (batch, 1), 0, fd, dtype=jnp.int32))
    x = jnp.concatenate(cols, axis=1)                               # (batch, num_fields)

    y = model(x)
    jax.block_until_ready(y)
    assert y.shape == (batch,) and y.dtype == jnp.float32

    # plain-JAX reference (f32)
    emb_ref = jnp.take(model.weight, x + model.offsets[None, :], axis=0)
    sos = jnp.sum(emb_ref, axis=1) ** 2
    ssq = jnp.sum(emb_ref ** 2, axis=1)
    y_ref = jax.nn.sigmoid(0.5 * jnp.sum(sos - ssq, axis=1))

    np.testing.assert_allclose(np.asarray(y), np.asarray(y_ref),
                               rtol=1e-4, atol=1e-5)
    print("KERNEL_OK")
</pallas_src>

<mosaic_0001>
module attributes {stable_mosaic.version = 11 : i64} {
  func.func @kernel(%arg0: i32, %arg1: memref<4x128xi32, #tpu.memory_space<vmem>>, %arg2: memref<64x128xbf16, #tpu.memory_space<vmem>>, %arg3: memref<1x128xf32, #tpu.memory_space<vmem>>) attributes {dimension_semantics = [#tpu.dimension_semantics<parallel>], iteration_bounds = array<i64: 1>, scalar_prefetch = 0 : i64, scratch_operands = 0 : i64, tpu.core_type = #tpu.core_type<tc>, window_params = [{transform_indices = @transform_0, window_bounds = array<i64: 4, 128>}, {pipeline_mode = #tpu.pipeline_mode<synchronous>, transform_indices = @transform_1, window_bounds = array<i64: 64, 128>}, {transform_indices = @transform_2, window_bounds = array<i64: 1, 128>}]} {
    %0 = tpu.iota {dimensions = array<i32: 0>} : vector<128x128xi32>
    %c0 = arith.constant 0 : index
    %c0_0 = arith.constant 0 : index
    %1 = vector.load %arg1[%c0, %c0_0] : memref<4x128xi32, #tpu.memory_space<vmem>>, vector<1x128xi32>
    %2 = vector.broadcast %1 : vector<1x128xi32> to vector<128x128xi32>
    %3 = arith.cmpi eq, %0, %2 : vector<128x128xi32>
    %4 = arith.extui %3 : vector<128x128xi1> to vector<128x128xi32>
    %5 = arith.sitofp %4 : vector<128x128xi32> to vector<128x128xf32>
    %c1 = arith.constant 1 : index
    %c0_1 = arith.constant 0 : index
    %6 = vector.load %arg1[%c1, %c0_1] : memref<4x128xi32, #tpu.memory_space<vmem>>, vector<1x128xi32>
    %7 = vector.broadcast %6 : vector<1x128xi32> to vector<128x128xi32>
    %8 = arith.cmpi eq, %0, %7 : vector<128x128xi32>
    %9 = arith.extui %8 : vector<128x128xi1> to vector<128x128xi32>
    %10 = arith.sitofp %9 : vector<128x128xi32> to vector<128x128xf32>
    %11 = arith.addf %5, %10 : vector<128x128xf32>
    %c2 = arith.constant 2 : index
    %c0_2 = arith.constant 0 : index
    %12 = vector.load %arg1[%c2, %c0_2] : memref<4x128xi32, #tpu.memory_space<vmem>>, vector<1x128xi32>
    %13 = vector.broadcast %12 : vector<1x128xi32> to vector<128x128xi32>
    %14 = arith.cmpi eq, %0, %13 : vector<128x128xi32>
    %15 = arith.extui %14 : vector<128x128xi1> to vector<128x128xi32>
    %16 = arith.sitofp %15 : vector<128x128xi32> to vector<128x128xf32>
    %17 = arith.addf %11, %16 : vector<128x128xf32>
    %c3 = arith.constant 3 : index
    %c0_3 = arith.constant 0 : index
    %18 = vector.load %arg1[%c3, %c0_3] : memref<4x128xi32, #tpu.memory_space<vmem>>, vector<1x128xi32>
    %19 = vector.broadcast %18 : vector<1x128xi32> to vector<128x128xi32>
    %20 = arith.cmpi eq, %0, %19 : vector<128x128xi32>
    %21 = arith.extui %20 : vector<128x128xi1> to vector<128x128xi32>
    %22 = arith.sitofp %21 : vector<128x128xi32> to vector<128x128xf32>
    %23 = arith.addf %17, %22 : vector<128x128xf32>
    %24 = arith.truncf %23 : vector<128x128xf32> to vector<128x128xbf16>
    %c0_4 = arith.constant 0 : index
    %c0_5 = arith.constant 0 : index
    %25 = vector.load %arg2[%c0_4, %c0_5] : memref<64x128xbf16, #tpu.memory_space<vmem>>, vector<64x128xbf16>
    %cst = arith.constant dense<0.000000e+00> : vector<64x128xf32>
    %26 = tpu.matmul %25, %24, %cst {dimension_numbers = #tpu.dot_dimension_numbers<[1], [0], [0], [1], [0, 0, 1, 1], [], []>} : vector<64x128xbf16>, vector<128x128xbf16>, vector<64x128xf32> -> vector<64x128xf32>
    %27 = vector.extract_strided_slice %26 {offsets = [0, 0], sizes = [32, 128], strides = [1, 1]} : vector<64x128xf32> to vector<32x128xf32>
    %28 = vector.extract_strided_slice %26 {offsets = [32, 0], sizes = [32, 128], strides = [1, 1]} : vector<64x128xf32> to vector<32x128xf32>
    %29 = arith.addf %27, %28 : vector<32x128xf32>
    %30 = vector.extract_strided_slice %29 {offsets = [0, 0], sizes = [16, 128], strides = [1, 1]} : vector<32x128xf32> to vector<16x128xf32>
    %31 = vector.extract_strided_slice %29 {offsets = [16, 0], sizes = [16, 128], strides = [1, 1]} : vector<32x128xf32> to vector<16x128xf32>
    %32 = arith.mulf %30, %30 : vector<16x128xf32>
    %33 = arith.subf %32, %31 : vector<16x128xf32>
    %cst_6 = arith.constant dense<0.000000e+00> : vector<128xf32>
    %34 = vector.multi_reduction <add>, %33, %cst_6 [0] : vector<16x128xf32> to vector<128xf32>
    %35 = vector.shape_cast %34 : vector<128xf32> to vector<1x128xf32>
    %cst_7 = arith.constant 5.000000e-01 : f32
    %36 = vector.broadcast %cst_7 : f32 to vector<1x128xf32>
    %37 = arith.mulf %36, %35 : vector<1x128xf32>
    %38 = arith.negf %37 : vector<1x128xf32>
    %39 = math.exp %38 : vector<1x128xf32>
    %cst_8 = arith.constant 1.000000e+00 : f32
    %40 = vector.broadcast %cst_8 : f32 to vector<1x128xf32>
    %41 = arith.addf %40, %39 : vector<1x128xf32>
    %42 = arith.divf %40, %41 : vector<1x128xf32>
    %c0_9 = arith.constant 0 : index
    %c0_10 = arith.constant 0 : index
    %43 = vector.load %arg3[%c0_9, %c0_10] : memref<1x128xf32, #tpu.memory_space<vmem>>, vector<1x128xf32>
    tpu.vector_store %arg3[%c0_9, %c0_10], %42 {strides = array<i32>} : memref<1x128xf32, #tpu.memory_space<vmem>>, vector<1x128xf32>,
    return
  }
  func.func @transform_0(%arg0: i32) -> (i32, i32) {
    %c0_i32 = arith.constant 0 : i32
    %c0_i32_0 = arith.constant 0 : i32
    return %c0_i32, %arg0 : i32, i32
  }
  func.func @transform_1(%arg0: i32) -> (i32, i32) {
    %c0_i32 = arith.constant 0 : i32
    %c0_i32_0 = arith.constant 0 : i32
    %c0_i32_1 = arith.constant 0 : i32
    return %c0_i32, %c0_i32_0 : i32, i32
  }
  func.func @transform_2(%arg0: i32) -> (i32, i32) {
    %c0_i32 = arith.constant 0 : i32
    %c0_i32_0 = arith.constant 0 : i32
    return %c0_i32, %arg0 : i32, i32
  }
}

</mosaic_0001>

<llo_original>
// kernel: _fused_forward.1
$region0: #{_fused_forward.1}
  #allocation0 [shape = 'u32[]', space=smem, size = 0x4, offset = 0x4, fixed_abs, tag = 'smem constant byte address 0x4 - core index']
  #allocation1 [shape = 'u32[144,128]{1,0:T(1,128)}', space=vmem, size = 0x12000, scoped, tag = 'internal scratch']
  %s0 = inlined_call_operand.vmem [shape: s32[4,128], index: 0, kind: input, shape index: {}]
  %s1 = inlined_call_operand.hbm [shape: bf16[64,128], index: 1, kind: input, shape index: {}]
  %s2 = inlined_call_operand.vmem [shape: f32[1,128], index: 2, kind: output, shape index: {}]
  %s3 = sld [smem:[#allocation0]]
  $region22: #{_fused_forward.1} parent=0
    _
  %s5 = ssub.s32 1, %s3
  %s6 = scalar_select 0, %s5, %s3
  $region1: #{_fused_forward.1} parent=0
    #allocation2 [shape = 'u8[16384]{0}', space=vmem, size = 0x4000, scoped, tag = 'input window, operand 1, single buffered']
    #allocation3 [shape = 's32[1]{0}', space=sflag, size = 0x4, scoped, tag = 'scoped memory for _fused_forward.1']
    %7 = vsyncpa [#allocation3], 0
    // Predicated region
    $region2: #{_fused_forward.1} parent=1 // pred_check
      _
    $region3: #{_fused_forward.1} parent=1 // pred_check_branch
      %9 = sbr.rel (0) target = $region5
    $region4: #{_fused_forward.1} parent=1 // pred_region
      _
    $region5: #{_fused_forward.1} parent=1 // pred_fallthru
      _
    // Predicated region
    $region6: #{_fused_forward.1} parent=1 // pred_check
      _
    $region7: #{_fused_forward.1} parent=1 // pred_check_branch
      %11 = sbr.rel (0) target = $region9
    $region8: #{_fused_forward.1} parent=1 // pred_region
      %s13 = ssub.s32 512, 512
      %14 = vsyncadd [#allocation3], %s13
      %s15 = sshll.u32 [#allocation2], 4
      %s16 = int_to_ptr.vmem [resolvable:$true] %s15
      %21 = dma.hbm_to_vmem [thread:$0]  %s1, 512, %s16, [#allocation3], 64, 64, 4
    $region9: #{_fused_forward.1} parent=1 // pred_fallthru
      _
    // Predicated region
    $region10: #{_fused_forward.1} parent=1 // pred_check
      _
    $region11: #{_fused_forward.1} parent=1 // pred_check_branch
      %23 = sbr.rel (0) target = $region13
    $region12: #{_fused_forward.1} parent=1 // pred_region
      %24 = dma.done [#allocation3], 512
    $region13: #{_fused_forward.1} parent=1 // pred_fallthru
      _
    %v26 = vlaneseq
    %v27 = vshrl.u32 %v26, 7
    %v28 = vadd.s32 %v27, 8
    %v29 = vadd.s32 %v27, 16
    %v30 = vadd.s32 %v27, 24
    %v31 = vadd.s32 %v27, 32
    %v32 = vadd.s32 %v27, 40
    %v33 = vadd.s32 %v27, 48
    %v34 = vadd.s32 %v27, 56
    %v35 = vadd.s32 %v27, 64
    %v36 = vadd.s32 %v27, 72
    %v37 = vadd.s32 %v27, 80
    %v38 = vadd.s32 %v27, 88
    %v39 = vadd.s32 %v27, 96
    %v40 = vadd.s32 %v27, 104
    %v41 = vadd.s32 %v27, 112
    %v42 = vadd.s32 %v27, 120
    %v43 = vld [vmem:[%s0] sm:$0x1]
    %v44 = vlaneseq
    %v45 = vshrl.u32 %v44, 7
    %v46 = vsub.s32 0, %v45
    %v47 = vrot.slane %v43, %v46
    %vm48 = vcmp.eq.s32.totalorder %v27, %v47
    %vm49 = vcmp.eq.s32.totalorder %v28, %v47
    %vm50 = vcmp.eq.s32.totalorder %v29, %v47
    %vm51 = vcmp.eq.s32.totalorder %v30, %v47
    %vm52 = vcmp.eq.s32.totalorder %v31, %v47
    %vm53 = vcmp.eq.s32.totalorder %v32, %v47
    %vm54 = vcmp.eq.s32.totalorder %v33, %v47
    %vm55 = vcmp.eq.s32.totalorder %v34, %v47
    %vm56 = vcmp.eq.s32.totalorder %v35, %v47
    %vm57 = vcmp.eq.s32.totalorder %v36, %v47
    %vm58 = vcmp.eq.s32.totalorder %v37, %v47
    %vm59 = vcmp.eq.s32.totalorder %v38, %v47
    %vm60 = vcmp.eq.s32.totalorder %v39, %v47
    %vm61 = vcmp.eq.s32.totalorder %v40, %v47
    %vm62 = vcmp.eq.s32.totalorder %v41, %v47
    %vm63 = vcmp.eq.s32.totalorder %v42, %v47
    %v64 = vsel %vm48, 1, 0
    %v65 = vsel %vm49, 1, 0
    %v66 = vsel %vm50, 1, 0
    %v67 = vsel %vm51, 1, 0
    %v68 = vsel %vm52, 1, 0
    %v69 = vsel %vm53, 1, 0
    %v70 = vsel %vm54, 1, 0
    %v71 = vsel %vm55, 1, 0
    %v72 = vsel %vm56, 1, 0
    %v73 = vsel %vm57, 1, 0
    %v74 = vsel %vm58, 1, 0
    %v75 = vsel %vm59, 1, 0
    %v76 = vsel %vm60, 1, 0
    %v77 = vsel %vm61, 1, 0
    %v78 = vsel %vm62, 1, 0
    %v79 = vsel %vm63, 1, 0
    %v80 = vcvt.s32.f32 %v64
    %v81 = vcvt.s32.f32 %v65
    %v82 = vcvt.s32.f32 %v66
    %v83 = vcvt.s32.f32 %v67
    %v84 = vcvt.s32.f32 %v68
    %v85 = vcvt.s32.f32 %v69
    %v86 = vcvt.s32.f32 %v70
    %v87 = vcvt.s32.f32 %v71
    %v88 = vcvt.s32.f32 %v72
    %v89 = vcvt.s32.f32 %v73
    %v90 = vcvt.s32.f32 %v74
    %v91 = vcvt.s32.f32 %v75
    %v92 = vcvt.s32.f32 %v76
    %v93 = vcvt.s32.f32 %v77
    %v94 = vcvt.s32.f32 %v78
    %v95 = vcvt.s32.f32 %v79
    %v96 = vld [vmem:[%s0 + $0x1] sm:$0x1]
    %v97 = vlaneseq
    %v98 = vshrl.u32 %v97, 7
    %v99 = vsub.s32 0, %v98
    %v100 = vrot.slane %v96, %v99
    %vm101 = vcmp.eq.s32.totalorder %v27, %v100
    %vm102 = vcmp.eq.s32.totalorder %v28, %v100
    %vm103 = vcmp.eq.s32.totalorder %v29, %v100
    %vm104 = vcmp.eq.s32.totalorder %v30, %v100
    %vm105 = vcmp.eq.s32.totalorder %v31, %v100
    %vm106 = vcmp.eq.s32.totalorder %v32, %v100
    %vm107 = vcmp.eq.s32.totalorder %v33, %v100
    %vm108 = vcmp.eq.s32.totalorder %v34, %v100
    %vm109 = vcmp.eq.s32.totalorder %v35, %v100
    %vm110 = vcmp.eq.s32.totalorder %v36, %v100
    %vm111 = vcmp.eq.s32.totalorder %v37, %v100
    %vm112 = vcmp.eq.s32.totalorder %v38, %v100
    %vm113 = vcmp.eq.s32.totalorder %v39, %v100
    %vm114 = vcmp.eq.s32.totalorder %v40, %v100
    %vm115 = vcmp.eq.s32.totalorder %v41, %v100
    %vm116 = vcmp.eq.s32.totalorder %v42, %v100
    %v117 = vsel %vm101, 1, 0
    %v118 = vsel %vm102, 1, 0
    %v119 = vsel %vm103, 1, 0
    %v120 = vsel %vm104, 1, 0
    %v121 = vsel %vm105, 1, 0
    %v122 = vsel %vm106, 1, 0
    %v123 = vsel %vm107, 1, 0
    %v124 = vsel %vm108, 1, 0
    %v125 = vsel %vm109, 1, 0
    %v126 = vsel %vm110, 1, 0
    %v127 = vsel %vm111, 1, 0
    %v128 = vsel %vm112, 1, 0
    %v129 = vsel %vm113, 1, 0
    %v130 = vsel %vm114, 1, 0
    %v131 = vsel %vm115, 1, 0
    %v132 = vsel %vm116, 1, 0
    %v133 = vcvt.s32.f32 %v117
    %v134 = vcvt.s32.f32 %v118
    %v135 = vcvt.s32.f32 %v119
    %v136 = vcvt.s32.f32 %v120
    %v137 = vcvt.s32.f32 %v121
    %v138 = vcvt.s32.f32 %v122
    %v139 = vcvt.s32.f32 %v123
    %v140 = vcvt.s32.f32 %v124
    %v141 = vcvt.s32.f32 %v125
    %v142 = vcvt.s32.f32 %v126
    %v143 = vcvt.s32.f32 %v127
    %v144 = vcvt.s32.f32 %v128
    %v145 = vcvt.s32.f32 %v129
    %v146 = vcvt.s32.f32 %v130
    %v147 = vcvt.s32.f32 %v131
    %v148 = vcvt.s32.f32 %v132
    %v149 = vadd.f32 %v80, %v133
    %v150 = vadd.f32 %v81, %v134
    %v151 = vadd.f32 %v82, %v135
    %v152 = vadd.f32 %v83, %v136
    %v153 = vadd.f32 %v84, %v137
    %v154 = vadd.f32 %v85, %v138
    %v155 = vadd.f32 %v86, %v139
    %v156 = vadd.f32 %v87, %v140
    %v157 = vadd.f32 %v88, %v141
    %v158 = vadd.f32 %v89, %v142
    %v159 = vadd.f32 %v90, %v143
    %v160 = vadd.f32 %v91, %v144
    %v161 = vadd.f32 %v92, %v145
    %v162 = vadd.f32 %v93, %v146
    %v163 = vadd.f32 %v94, %v147
    %v164 = vadd.f32 %v95, %v148
    %v165 = vld [vmem:[%s0 + $0x2] sm:$0x1]
    %v166 = vlaneseq
    %v167 = vshrl.u32 %v166, 7
    %v168 = vsub.s32 0, %v167
    %v169 = vrot.slane %v165, %v168
    %vm170 = vcmp.eq.s32.totalorder %v27, %v169
    %vm171 = vcmp.eq.s32.totalorder %v28, %v169
    %vm172 = vcmp.eq.s32.totalorder %v29, %v169
    %vm173 = vcmp.eq.s32.totalorder %v30, %v169
    %vm174 = vcmp.eq.s32.totalorder %v31, %v169
    %vm175 = vcmp.eq.s32.totalorder %v32, %v169
    %vm176 = vcmp.eq.s32.totalorder %v33, %v169
    %vm177 = vcmp.eq.s32.totalorder %v34, %v169
    %vm178 = vcmp.eq.s32.totalorder %v35, %v169
    %vm179 = vcmp.eq.s32.totalorder %v36, %v169
    %vm180 = vcmp.eq.s32.totalorder %v37, %v169
    %vm181 = vcmp.eq.s32.totalorder %v38, %v169
    %vm182 = vcmp.eq.s32.totalorder %v39, %v169
    %vm183 = vcmp.eq.s32.totalorder %v40, %v169
    %vm184 = vcmp.eq.s32.totalorder %v41, %v169
    %vm185 = vcmp.eq.s32.totalorder %v42, %v169
    %v186 = vsel %vm170, 1, 0
    %v187 = vsel %vm171, 1, 0
    %v188 = vsel %vm172, 1, 0
    %v189 = vsel %vm173, 1, 0
    %v190 = vsel %vm174, 1, 0
    %v191 = vsel %vm175, 1, 0
    %v192 = vsel %vm176, 1, 0
    %v193 = vsel %vm177, 1, 0
    %v194 = vsel %vm178, 1, 0
    %v195 = vsel %vm179, 1, 0
    %v196 = vsel %vm180, 1, 0
    %v197 = vsel %vm181, 1, 0
    %v198 = vsel %vm182, 1, 0
    %v199 = vsel %vm183, 1, 0
    %v200 = vsel %vm184, 1, 0
    %v201 = vsel %vm185, 1, 0
    %v202 = vcvt.s32.f32 %v186
    %v203 = vcvt.s32.f32 %v187
    %v204 = vcvt.s32.f32 %v188
    %v205 = vcvt.s32.f32 %v189
    %v206 = vcvt.s32.f32 %v190
    %v207 = vcvt.s32.f32 %v191
    %v208 = vcvt.s32.f32 %v192
    %v209 = vcvt.s32.f32 %v193
    %v210 = vcvt.s32.f32 %v194
    %v211 = vcvt.s32.f32 %v195
    %v212 = vcvt.s32.f32 %v196
    %v213 = vcvt.s32.f32 %v197
    %v214 = vcvt.s32.f32 %v198
    %v215 = vcvt.s32.f32 %v199
    %v216 = vcvt.s32.f32 %v200
    %v217 = vcvt.s32.f32 %v201
    %v218 = vadd.f32 %v149, %v202
    %v219 = vadd.f32 %v150, %v203
    %v220 = vadd.f32 %v151, %v204
    %v221 = vadd.f32 %v152, %v205
    %v222 = vadd.f32 %v153, %v206
    %v223 = vadd.f32 %v154, %v207
    %v224 = vadd.f32 %v155, %v208
    %v225 = vadd.f32 %v156, %v209
    %v226 = vadd.f32 %v157, %v210
    %v227 = vadd.f32 %v158, %v211
    %v228 = vadd.f32 %v159, %v212
    %v229 = vadd.f32 %v160, %v213
    %v230 = vadd.f32 %v161, %v214
    %v231 = vadd.f32 %v162, %v215
    %v232 = vadd.f32 %v163, %v216
    %v233 = vadd.f32 %v164, %v217
    %v234 = vld [vmem:[%s0 + $0x3] sm:$0x1]
    %v235 = vlaneseq
    %v236 = vshrl.u32 %v235, 7
    %v237 = vsub.s32 0, %v236
    %v238 = vrot.slane %v234, %v237
    %vm239 = vcmp.eq.s32.totalorder %v27, %v238
    %vm240 = vcmp.eq.s32.totalorder %v28, %v238
    %vm241 = vcmp.eq.s32.totalorder %v29, %v238
    %vm242 = vcmp.eq.s32.totalorder %v30, %v238
    %vm243 = vcmp.eq.s32.totalorder %v31, %v238
    %vm244 = vcmp.eq.s32.totalorder %v32, %v238
    %vm245 = vcmp.eq.s32.totalorder %v33, %v238
    %vm246 = vcmp.eq.s32.totalorder %v34, %v238
    %vm247 = vcmp.eq.s32.totalorder %v35, %v238
    %vm248 = vcmp.eq.s32.totalorder %v36, %v238
    %vm249 = vcmp.eq.s32.totalorder %v37, %v238
    %vm250 = vcmp.eq.s32.totalorder %v38, %v238
    %vm251 = vcmp.eq.s32.totalorder %v39, %v238
    %vm252 = vcmp.eq.s32.totalorder %v40, %v238
    %vm253 = vcmp.eq.s32.totalorder %v41, %v238
    %vm254 = vcmp.eq.s32.totalorder %v42, %v238
    %v255 = vsel %vm239, 1, 0
    %v256 = vsel %vm240, 1, 0
    %v257 = vsel %vm241, 1, 0
    %v258 = vsel %vm242, 1, 0
    %v259 = vsel %vm243, 1, 0
    %v260 = vsel %vm244, 1, 0
    %v261 = vsel %vm245, 1, 0
    %v262 = vsel %vm246, 1, 0
    %v263 = vsel %vm247, 1, 0
    %v264 = vsel %vm248, 1, 0
    %v265 = vsel %vm249, 1, 0
    %v266 = vsel %vm250, 1, 0
    %v267 = vsel %vm251, 1, 0
    %v268 = vsel %vm252, 1, 0
    %v269 = vsel %vm253, 1, 0
    %v270 = vsel %vm254, 1, 0
    %v271 = vcvt.s32.f32 %v255
    %v272 = vcvt.s32.f32 %v256
    %v273 = vcvt.s32.f32 %v257
    %v274 = vcvt.s32.f32 %v258
    %v275 = vcvt.s32.f32 %v259
    %v276 = vcvt.s32.f32 %v260
    %v277 = vcvt.s32.f32 %v261
    %v278 = vcvt.s32.f32 %v262
    %v279 = vcvt.s32.f32 %v263
    %v280 = vcvt.s32.f32 %v264
    %v281 = vcvt.s32.f32 %v265
    %v282 = vcvt.s32.f32 %v266
    %v283 = vcvt.s32.f32 %v267
    %v284 = vcvt.s32.f32 %v268
    %v285 = vcvt.s32.f32 %v269
    %v286 = vcvt.s32.f32 %v270
    %v287 = vadd.f32 %v218, %v271
    %v288 = vadd.f32 %v219, %v272
    %v289 = vadd.f32 %v220, %v273
    %v290 = vadd.f32 %v221, %v274
    %v291 = vadd.f32 %v222, %v275
    %v292 = vadd.f32 %v223, %v276
    %v293 = vadd.f32 %v224, %v277
    %v294 = vadd.f32 %v225, %v278
    %v295 = vadd.f32 %v226, %v279
    %v296 = vadd.f32 %v227, %v280
    %v297 = vadd.f32 %v228, %v281
    %v298 = vadd.f32 %v229, %v282
    %v299 = vadd.f32 %v230, %v283
    %v300 = vadd.f32 %v231, %v284
    %v301 = vadd.f32 %v232, %v285
    %v302 = vadd.f32 %v233, %v286
    %v303 = vpack.c.bf16 %v288, %v287
    %v304 = vpack.c.bf16 %v290, %v289
    %v305 = vpack.c.bf16 %v292, %v291
    %v306 = vpack.c.bf16 %v294, %v293
    %v307 = vpack.c.bf16 %v296, %v295
    %v308 = vpack.c.bf16 %v298, %v297
    %v309 = vpack.c.bf16 %v300, %v299
    %v310 = vpack.c.bf16 %v302, %v301
    %v311 = vld [vmem:[#allocation2] sm:$0xf]
    %v312 = vld [vmem:[#allocation2 + $0x4] sm:$0xf]
    %v313 = vld [vmem:[#allocation2 + $0x8] sm:$0xf]
    %v314 = vld [vmem:[#allocation2 + $0xc] sm:$0xf]
    %v315 = vld [vmem:[#allocation2 + $0x10] sm:$0xf]
    %v316 = vld [vmem:[#allocation2 + $0x14] sm:$0xf]
    %v317 = vld [vmem:[#allocation2 + $0x18] sm:$0xf]
    %v318 = vld [vmem:[#allocation2 + $0x1c] sm:$0xf]
    %v327 = vunpack.c.l.b16 %v311
    %v328 = vunpack.c.l.b16 %v312
    %v329 = vunpack.c.l.b16 %v313
    %v330 = vunpack.c.l.b16 %v314
    %v331 = vunpack.c.l.b16 %v315
    %v332 = vunpack.c.l.b16 %v316
    %v333 = vunpack.c.l.b16 %v317
    %v334 = vunpack.c.l.b16 %v318
    %v335 = vpack.c.b16 %v328, %v327
    %v336 = vpack.c.b16 %v330, %v329
    %v337 = vpack.c.b16 %v332, %v331
    %v338 = vpack.c.b16 %v334, %v333
    %343 = vmatprep.subr.bf16.mxu0 0
    %344 = vmatpush1.bf16.msra.mxu0 %v303
    %345 = vmatprep.subr.bf16.mxu0 0
    %346 = vmatpush1.bf16.msra.mxu0 %v304
    %347 = vmatprep.subr.bf16.mxu0 0
    %348 = vmatpush1.bf16.msra.mxu0 %v305
    %349 = vmatprep.subr.bf16.mxu0 0
    %350 = vmatpush1.bf16.msra.mxu0 %v306
    %351 = vmatprep.subr.bf16.mxu0 0
    %352 = vmatpush1.bf16.msra.mxu0 %v307
    %353 = vmatprep.subr.bf16.mxu0 0
    %354 = vmatpush1.bf16.msra.mxu0 %v308
    %355 = vmatprep.subr.bf16.mxu0 0
    %356 = vmatpush1.bf16.msra.mxu0 %v309
    %357 = vmatprep.subr.bf16.mxu0 0
    %358 = vmatpush1.bf16.msra.mxu0 %v310
    %359 = vmatprep.subr.bf16.mxu0 0
    %360 = vmatpush1.bf16.msra.mxu0 0
    %361 = vmatprep.subr.bf16.mxu0 0
    %362 = vmatpush1.bf16.msra.mxu0 0
    %363 = vmatprep.subr.bf16.mxu0 0
    %364 = vmatpush1.bf16.msra.mxu0 0
    %365 = vmatprep.subr.bf16.mxu0 0
    %366 = vmatpush1.bf16.msra.mxu0 0
    %367 = vmatprep.subr.bf16.mxu0 0
    %368 = vmatpush1.bf16.msra.mxu0 0
    %369 = vmatprep.subr.bf16.mxu0 0
    %370 = vmatpush1.bf16.msra.mxu0 0
    %371 = vmatprep.subr.bf16.mxu0 0
    %372 = vmatpush1.bf16.msra.mxu0 0
    %373 = vmatprep.subr.bf16.mxu0 0
    %374 = vmatpush1.bf16.msra.mxu0 0
    %375 = vmatprep.mubr.bf16.mxu0 0
    %376 = vmatmul.mubr.bf16.gmra.mrb[0].mxu0 %v335
    %v377 = vpop.f32.mrb[0].mxu0
    %v378 = vadd.f32 0.0, %v377
    %v379 = vpop.f32.mrb[0].mxu0
    %v380 = vpop.f32.mrb[0].mxu0
    %v381 = vadd.f32 0.0, %v380
    %v382 = vpop.f32.mrb[0].mxu0
    %383 = vmatprep.mubr.bf16.mxu0 0
    %384 = vmatmul.mubr.bf16.gmra.mrb[0].mxu0 %v336
    %v385 = vpop.f32.mrb[0].mxu0
    %v386 = vadd.f32 0.0, %v385
    %v387 = vpop.f32.mrb[0].mxu0
    %v388 = vpop.f32.mrb[0].mxu0
    %v389 = vadd.f32 0.0, %v388
    %v390 = vpop.f32.mrb[0].mxu0
    %391 = vmatprep.mubr.bf16.mxu0 0
    %392 = vmatmul.mubr.bf16.gmra.mrb[0].mxu0 %v337
    %v393 = vpop.f32.mrb[0].mxu0
    %v394 = vadd.f32 0.0, %v393
    %v395 = vpop.f32.mrb[0].mxu0
    %v396 = vpop.f32.mrb[0].mxu0
    %v397 = vadd.f32 0.0, %v396
    %v398 = vpop.f32.mrb[0].mxu0
    %399 = vmatprep.mubr.bf16.mxu0 0
    %400 = vmatmul.mubr.bf16.gmra.mrb[0].mxu0 %v338
    %v401 = vpop.f32.mrb[0].mxu0
    %v402 = vadd.f32 0.0, %v401
    %v403 = vpop.f32.mrb[0].mxu0
    %v404 = vpop.f32.mrb[0].mxu0
    %v405 = vadd.f32 0.0, %v404
    %v406 = vpop.f32.mrb[0].mxu0
    %407 = vdwg.mxu0
    %v408 = vadd.f32 %v378, %v394
    %v409 = vadd.f32 %v381, %v397
    %v410 = vadd.f32 %v386, %v402
    %v411 = vadd.f32 %v389, %v405
    %v412 = vmul.f32 %v408, %v408
    %v413 = vmul.f32 %v409, %v409
    %v414 = vsub.f32 %v412, %v410
    %v415 = vsub.f32 %v413, %v411
    %v416 = vadd.f32 %v414, %v415
    %v417 = vrot.slane %v416, 4
    %v418 = vadd.f32 %v416, %v417
    %v419 = vrot.slane %v418, 2
    %v420 = vadd.f32 %v418, %v419
    %v421 = vrot.slane %v420, 1
    %v422 = vadd.f32 %v420, %v421
    %v423 = vmul.f32 %v422, 0.5
    %v424 = vxor.u32 %v423, 2147483648
    %v425 = vmul.f32 %v424, 1.442695
    %v426 = vpow.pop %v425
    %v427 = vadd.f32 %v426, 1.0
    %v428 = vrcp.pop %v427
    %v429 = vmul.f32 1.0, %v428
    %430 = vst [vmem:[%s2] sm:$0x1] %v429
    // Predicated region
    $region14: #{_fused_forward.1} parent=1 // pred_check
      _
    $region15: #{_fused_forward.1} parent=1 // pred_check_branch
      %432 = sbr.rel (0) target = $region17
    $region16: #{_fused_forward.1} parent=1 // pred_region
      _
    $region17: #{_fused_forward.1} parent=1 // pred_fallthru
      _
    // Predicated region
    $region18: #{_fused_forward.1} parent=1 // pred_check
      _
    $region19: #{_fused_forward.1} parent=1 // pred_check_branch
      %434 = sbr.rel (0) target = $region21
    $region20: #{_fused_forward.1} parent=1 // pred_region
      _
    $region21: #{_fused_forward.1} parent=1 // pred_fallthru
      _
    %435 = vsyncpa [#allocation3], 1

</llo_original>
